<compile_context>
chip_gen: v7x
topology: tpu7x:2x2x1
jax: 0.10.0
libtpu: 0.0.40
codegen_flags: <defaults>
</compile_context>

<pallas_src>
import jax
import jax.numpy as jnp
from jax.experimental import pallas as pl
from jax.experimental.pallas import tpu as pltpu


# ------------------------------ Pallas kernels ------------------------------ #
def _layer1_kernel(x_ref, w1_ref, b1_ref, h_ref):
    # h = ReLU(x @ W1 + b1); x cast to bf16 in-kernel, f32 MXU accumulation,
    # bf16 output activation.
    x = x_ref[...].astype(jnp.bfloat16)
    h = jnp.dot(x, w1_ref[...], preferred_element_type=jnp.float32) + b1_ref[...]
    h_ref[...] = jnp.maximum(h, 0.0).astype(h_ref.dtype)


def _layer2_kernel(h_ref, w2_ref, b2_ref, out_ref):
    # One lane-dense tile of logits = h @ W2 + b2 (f32 accumulation/output).
    out_ref[...] = (jnp.dot(h_ref[...], w2_ref[...],
                            preferred_element_type=jnp.float32)
                    + b2_ref[...])


# ------------------------------ tiling helpers ------------------------------ #
def _round_up(x, m):
    return -(-x // m) * m


def _pick_tile_n(num_answers, max_tile=1152):
    """(tile_n, n_pad): lane-dense output tile and padded answer dim.

    Pads N up to a multiple of the tile (rather than shrinking the tile) and
    prefers an even number of grid steps so a v7x megacore 'parallel' split
    over N stays balanced.
    """
    n128 = _round_up(num_answers, 128)
    if n128 <= max_tile:
        return n128, n128
    steps = -(-n128 // max_tile)
    if steps % 2 == 1:
        steps += 1                      # even step count for megacore balance
    tile_n = -(-(n128 // 128) // steps) * 128
    return tile_n, tile_n * steps


def _pick_tile_mid(mid):
    """Split MID across two parallel grid steps when large and lane-aligned
    (lets v7x stream W1 with both TensorCores); otherwise a single block."""
    if mid >= 512 and mid % 256 == 0:
        return mid // 2
    return mid


# ------------------------------ layer wrappers ------------------------------ #
def _linear_relu(x, w1, b1):
    """ReLU(x @ w1 + b1), bf16 output, MID tiled on a 'parallel' grid axis."""
    B, IN = x.shape
    MID = w1.shape[1]
    tile_mid = _pick_tile_mid(MID)
    grid = (MID // tile_mid,)
    return pl.pallas_call(
        _layer1_kernel,
        out_shape=jax.ShapeDtypeStruct((B, MID), jnp.bfloat16),
        grid_spec=pltpu.PrefetchScalarGridSpec(
            num_scalar_prefetch=0,
            grid=grid,
            in_specs=[
                pl.BlockSpec((B, IN), lambda j: (0, 0)),          # x (cast in-kernel)
                pl.BlockSpec((IN, tile_mid), lambda j: (0, j)),   # W1 tile (streamed)
                pl.BlockSpec((1, tile_mid), lambda j: (0, j)),    # b1 tile
            ],
            out_specs=pl.BlockSpec((B, tile_mid), lambda j: (0, j)),
        ),
        compiler_params=pltpu.CompilerParams(
            dimension_semantics=("parallel",)),
        cost_estimate=pl.CostEstimate(
            flops=2 * B * IN * MID,
            transcendentals=0,
            bytes_accessed=B * IN * x.dtype.itemsize
                           + IN * MID * 2 + MID * 4 + B * MID * 2,
        ),
    )(x, w1, b1)


def _linear_out(h, w2, b2, tile_n):
    """h @ w2 + b2, tiled over the (padded, lane-dense) answer dimension."""
    B, MID = h.shape
    N_pad = w2.shape[1]
    assert N_pad % tile_n == 0
    grid = (N_pad // tile_n,)
    return pl.pallas_call(
        _layer2_kernel,
        out_shape=jax.ShapeDtypeStruct((B, N_pad), jnp.float32),
        grid_spec=pltpu.PrefetchScalarGridSpec(
            num_scalar_prefetch=0,
            grid=grid,
            in_specs=[
                pl.BlockSpec((B, MID), lambda j: (0, 0)),         # h (tiny, fetched once)
                pl.BlockSpec((MID, tile_n), lambda j: (0, j)),    # W2 tile (streamed)
                pl.BlockSpec((1, tile_n), lambda j: (0, j)),      # b2 tile
            ],
            out_specs=pl.BlockSpec((B, tile_n), lambda j: (0, j)),
        ),
        compiler_params=pltpu.CompilerParams(
            # No cross-iteration state -> N axis truly parallel (v7x megacore
            # splits the W2 streaming across both TensorCores).
            dimension_semantics=("parallel",)),
        cost_estimate=pl.CostEstimate(
            flops=2 * B * MID * N_pad,
            transcendentals=0,
            bytes_accessed=B * MID * 2 + MID * N_pad * 2
                           + N_pad * 4 + B * N_pad * 4,
        ),
    )(h, w2, b2)


# ------------------------- parameter setup (glue) --------------------------- #
def _weight_norm_dim_none(v, g):
    # PyTorch weight_norm(..., dim=None): W = g * V / ||V||_F (scalar norm).
    return g * v / jnp.linalg.norm(v)


def make_vqa_head_params(key, hid_dim, num_answers, *, max_tile_n=1152):
    """SimpleClassifier(in=hid, hid=2*hid, out=num_answers) parameters.

    Weight-norm folding, bf16 casting and lane padding of W2/b2 are done once
    here (not per forward call).
    """
    k1, k2, k3, k4, k5, k6 = jax.random.split(key, 6)
    mid = 2 * hid_dim
    _, n_pad = _pick_tile_n(num_answers, max_tile_n)

    # Linear 1: PyTorch weight shape (mid, hid) -> stored transposed (hid, mid).
    v1 = jax.random.normal(k1, (hid_dim, mid), jnp.float32) * 0.05
    g1 = 1.0 + 0.1 * jax.random.normal(k2, (), jnp.float32)
    w1 = _weight_norm_dim_none(v1, g1).astype(jnp.bfloat16)
    b1 = 0.01 * jax.random.normal(k3, (1, mid), jnp.float32)

    # Linear 2: PyTorch weight shape (num_answers, mid) -> stored (mid, N).
    v2 = jax.random.normal(k4, (mid, num_answers), jnp.float32) * 0.05
    g2 = 1.0 + 0.1 * jax.random.normal(k5, (), jnp.float32)
    w2 = _weight_norm_dim_none(v2, g2)
    b2 = 0.01 * jax.random.normal(k6, (1, num_answers), jnp.float32)

    pad = n_pad - num_answers
    w2p = jnp.pad(w2, ((0, 0), (0, pad))).astype(jnp.bfloat16)
    b2p = jnp.pad(b2, ((0, 0), (0, pad)))
    return w1, b1, w2p, b2p


# --------------------------------- forward ----------------------------------- #
def vqa_model_logits(x, params, num_answers, *, max_tile_n=1152):
    """VQAModel.forward hot path: logit = self.logit_fc(x).

    x: (B, hid_dim) encoder output.  Returns (B, num_answers) f32 logits.
    Padded answer columns (>= num_answers) are sliced off here; consumers that
    can take the padded buffer should use vqa_model_logits_padded directly.
    """
    logits_padded = vqa_model_logits_padded(x, params, num_answers,
                                            max_tile_n=max_tile_n)
    return logits_padded[:, :num_answers]


def vqa_model_logits_padded(x, params, num_answers, *, max_tile_n=1152):
    w1, b1, w2p, b2p = params
    tile_n, n_pad = _pick_tile_n(num_answers, max_tile_n)
    assert w2p.shape[1] == n_pad, "params padded for a different tile choice"

    h = _linear_relu(x, w1, b1)                       # (B, MID) bf16
    # TODO(synk): Dropout(0.5, inplace) between ReLU and the second Linear is
    #             identity at inference and is omitted.
    return _linear_out(h, w2p, b2p, tile_n)           # (B, N_pad) f32


# ---------------------------------- demo ------------------------------------ #
if __name__ == "__main__":
    # Small shapes consistent with the forward:
    #   x = lxrt_encoder output: (batch, hid_dim); logits: (batch, num_answers)
    BATCH = 2
    HID_DIM = 32          # stand-in for lxrt_encoder.dim (768 in the real model)
    NUM_ANSWERS = 2274    # hard-coded out_dim in the module

    key = jax.random.PRNGKey(0)
    kx, kp = jax.random.split(key)
    x = jax.random.normal(kx, (BATCH, HID_DIM), jnp.float32)
    params = make_vqa_head_params(kp, HID_DIM, NUM_ANSWERS)

    logits = vqa_model_logits(x, params, NUM_ANSWERS)
    logits = jax.block_until_ready(logits)
    assert logits.shape == (BATCH, NUM_ANSWERS)

    # Pure-JAX reference with the same bf16 quantization as the kernel path.
    w1, b1, w2p, b2p = params
    xq = x.astype(jnp.bfloat16).astype(jnp.float32)
    w1f = w1.astype(jnp.float32)
    w2f = w2p.astype(jnp.float32)
    h_ref = jnp.maximum(xq @ w1f + b1, 0.0)
    h_ref = h_ref.astype(jnp.bfloat16).astype(jnp.float32)
    ref = (h_ref @ w2f + b2p)[:, :NUM_ANSWERS]
    assert jnp.allclose(logits, ref, atol=2e-3, rtol=2e-2), (
        float(jnp.max(jnp.abs(logits - ref))))

    print("KERNEL_OK")
</pallas_src>

<mosaic_0001>
module attributes {stable_mosaic.version = 11 : i64} {
  func.func @_layer1_kernel(%arg0: i32, %arg1: memref<2x32xf32, #tpu.memory_space<vmem>>, %arg2: memref<32x64xbf16, #tpu.memory_space<vmem>>, %arg3: memref<1x64xf32, #tpu.memory_space<vmem>>, %arg4: memref<2x64xbf16, #tpu.memory_space<vmem>>) attributes {dimension_semantics = [#tpu.dimension_semantics<parallel>], iteration_bounds = array<i64: 1>, scalar_prefetch = 0 : i64, scratch_operands = 0 : i64, tpu.core_type = #tpu.core_type<tc>, window_params = [{pipeline_mode = #tpu.pipeline_mode<synchronous>, transform_indices = @transform_0, window_bounds = array<i64: 2, 32>}, {transform_indices = @transform_1, window_bounds = array<i64: 32, 64>}, {transform_indices = @transform_2, window_bounds = array<i64: 1, 64>}, {transform_indices = @transform_3, window_bounds = array<i64: 2, 64>}]} {
    %c0 = arith.constant 0 : index
    %c0_0 = arith.constant 0 : index
    %0 = vector.load %arg1[%c0, %c0_0] : memref<2x32xf32, #tpu.memory_space<vmem>>, vector<2x32xf32>
    %1 = arith.truncf %0 : vector<2x32xf32> to vector<2x32xbf16>
    %c0_1 = arith.constant 0 : index
    %c0_2 = arith.constant 0 : index
    %2 = vector.load %arg2[%c0_1, %c0_2] : memref<32x64xbf16, #tpu.memory_space<vmem>>, vector<32x64xbf16>
    %cst = arith.constant dense<0.000000e+00> : vector<2x64xf32>
    %3 = tpu.matmul %1, %2, %cst {dimension_numbers = #tpu.dot_dimension_numbers<[1], [0], [0], [1], [0, 0, 1, 1], [], []>} : vector<2x32xbf16>, vector<32x64xbf16>, vector<2x64xf32> -> vector<2x64xf32>
    %c0_3 = arith.constant 0 : index
    %c0_4 = arith.constant 0 : index
    %4 = vector.load %arg3[%c0_3, %c0_4] : memref<1x64xf32, #tpu.memory_space<vmem>>, vector<1x64xf32>
    %5 = vector.broadcast %4 : vector<1x64xf32> to vector<2x64xf32>
    %6 = arith.addf %3, %5 : vector<2x64xf32>
    %cst_5 = arith.constant 0.000000e+00 : f32
    %7 = vector.broadcast %cst_5 : f32 to vector<2x64xf32>
    %8 = arith.maximumf %6, %7 : vector<2x64xf32>
    %9 = arith.truncf %8 : vector<2x64xf32> to vector<2x64xbf16>
    %c0_6 = arith.constant 0 : index
    %c0_7 = arith.constant 0 : index
    %10 = vector.load %arg4[%c0_6, %c0_7] : memref<2x64xbf16, #tpu.memory_space<vmem>>, vector<2x64xbf16>
    tpu.vector_store %arg4[%c0_6, %c0_7], %9 {strides = array<i32>} : memref<2x64xbf16, #tpu.memory_space<vmem>>, vector<2x64xbf16>,
    return
  }
  func.func @transform_0(%arg0: i32) -> (i32, i32) {
    %c0_i32 = arith.constant 0 : i32
    %c0_i32_0 = arith.constant 0 : i32
    %c0_i32_1 = arith.constant 0 : i32
    return %c0_i32, %c0_i32_0 : i32, i32
  }
  func.func @transform_1(%arg0: i32) -> (i32, i32) {
    %c0_i32 = arith.constant 0 : i32
    %c0_i32_0 = arith.constant 0 : i32
    return %c0_i32, %arg0 : i32, i32
  }
  func.func @transform_2(%arg0: i32) -> (i32, i32) {
    %c0_i32 = arith.constant 0 : i32
    %c0_i32_0 = arith.constant 0 : i32
    return %c0_i32, %arg0 : i32, i32
  }
  func.func @transform_3(%arg0: i32) -> (i32, i32) {
    %c0_i32 = arith.constant 0 : i32
    %c0_i32_0 = arith.constant 0 : i32
    return %c0_i32, %arg0 : i32, i32
  }
}

</mosaic_0001>

<llo_original>
// kernel: tpu_custom_call.1
$region0: #{tpu_custom_call.1}
  #allocation0 [shape = 'u32[]', space=smem, size = 0x4, offset = 0x4, fixed_abs, tag = 'smem constant byte address 0x4 - core index']
  #allocation1 [shape = 'u32[144,128]{1,0:T(1,128)}', space=vmem, size = 0x12000, scoped, tag = 'internal scratch']
  %s0 = inlined_call_operand.hbm [shape: f32[2,32], index: 0, kind: input, shape index: {}]
  %s1 = inlined_call_operand.hbm [shape: bf16[32,64], index: 1, kind: input, shape index: {}]
  %s2 = inlined_call_operand.vmem [shape: f32[1,64], index: 2, kind: input, shape index: {}]
  %s3 = inlined_call_operand.hbm [shape: bf16[2,64], index: 3, kind: output, shape index: {}]
  %s4 = sld [smem:[#allocation0]]
  $region30: #{tpu_custom_call.1} parent=0
    _
  %s6 = ssub.s32 1, %s4
  %s7 = scalar_select 0, %s6, %s4
  $region1: #{tpu_custom_call.1} parent=0
    #allocation2 [shape = 'u8[1024]{0}', space=vmem, size = 0x400, scoped, tag = 'input window, operand 0, single buffered']
    #allocation3 [shape = 's32[1]{0}', space=sflag, size = 0x4, scoped, tag = 'scoped memory for tpu_custom_call.1']
    #allocation4 [shape = 's32[1]{0}', space=sflag, size = 0x4, scoped, tag = 'scoped memory for tpu_custom_call.1']
    #allocation5 [shape = 'u8[8192]{0}', space=vmem, size = 0x2000, scoped, tag = 'input window, operand 1, single buffered']
    #allocation6 [shape = 's32[1]{0}', space=sflag, size = 0x4, scoped, tag = 'scoped memory for tpu_custom_call.1']
    #allocation7 [shape = 'u8[512]{0}', space=vmem, size = 0x400, scoped, tag = 'output window, operand 0, single buffered']
    %8 = vsyncpa [#allocation3], 0
    %9 = vsyncpa [#allocation6], 0
    %10 = vsyncpa [#allocation4], 0
    // Predicated region
    $region2: #{tpu_custom_call.1} parent=1 // pred_check
      _
    $region3: #{tpu_custom_call.1} parent=1 // pred_check_branch
      %12 = sbr.rel (0) target = $region5
    $region4: #{tpu_custom_call.1} parent=1 // pred_region
      %s14 = ssub.s32 32, 32
      %15 = vsyncadd [#allocation3], %s14
      %s17 = sshll.u32 [#allocation2], 4
      %s18 = int_to_ptr.vmem [resolvable:$true] %s17
      %20 = dma.hbm_to_vmem [thread:$0]  %s0, 32, %s18, [#allocation3]
    $region5: #{tpu_custom_call.1} parent=1 // pred_fallthru
      _
    // Predicated region
    $region6: #{tpu_custom_call.1} parent=1 // pred_check
      _
    $region7: #{tpu_custom_call.1} parent=1 // pred_check_branch
      %22 = sbr.rel (0) target = $region9
    $region8: #{tpu_custom_call.1} parent=1 // pred_region
      %s24 = ssub.s32 256, 256
      %25 = vsyncadd [#allocation6], %s24
      %s26 = sshll.u32 [#allocation5], 4
      %s27 = int_to_ptr.vmem [resolvable:$true] %s26
      %32 = dma.hbm_to_vmem [thread:$0]  %s1, 256, %s27, [#allocation6], 64, 64, 4
    $region9: #{tpu_custom_call.1} parent=1 // pred_fallthru
      _
    // Predicated region
    $region10: #{tpu_custom_call.1} parent=1 // pred_check
      _
    $region11: #{tpu_custom_call.1} parent=1 // pred_check_branch
      %34 = sbr.rel (0) target = $region13
    $region12: #{tpu_custom_call.1} parent=1 // pred_region
      _
    $region13: #{tpu_custom_call.1} parent=1 // pred_fallthru
      _
    // Predicated region
    $region14: #{tpu_custom_call.1} parent=1 // pred_check
      _
    $region15: #{tpu_custom_call.1} parent=1 // pred_check_branch
      %36 = sbr.rel (0) target = $region17
    $region16: #{tpu_custom_call.1} parent=1 // pred_region
      %37 = dma.done [#allocation3], 32
    $region17: #{tpu_custom_call.1} parent=1 // pred_fallthru
      _
    // Predicated region
    $region18: #{tpu_custom_call.1} parent=1 // pred_check
      _
    $region19: #{tpu_custom_call.1} parent=1 // pred_check_branch
      %39 = sbr.rel (0) target = $region21
    $region20: #{tpu_custom_call.1} parent=1 // pred_region
      %40 = dma.done [#allocation6], 256
    $region21: #{tpu_custom_call.1} parent=1 // pred_fallthru
      _
    %v42 = vld [vmem:[#allocation2] sm:$0x3]
    %v43 = vpack.c.bf16 %v42, %v42
    %v44 = vld [vmem:[#allocation5] sm:$0xf]
    %v45 = vld [vmem:[#allocation5 + $0x4] sm:$0xf]
    %v46 = vld [vmem:[#allocation5 + $0x8] sm:$0xf]
    %v47 = vld [vmem:[#allocation5 + $0xc] sm:$0xf]
    %v48 = vld [vmem:[%s2] sm:$0x1]
    %v50 = vlaneseq
    %v51 = vshrl.u32 %v50, 7
    %v52 = vsub.s32 0, %v51
    %v53 = vrot.slane %v48, %v52
    %v59 = vunpack.c.l.b16 %v44
    %v60 = vunpack.c.l.b16 %v45
    %v61 = vunpack.c.l.b16 %v46
    %v62 = vunpack.c.l.b16 %v47
    %v63 = vpack.c.b16 %v60, %v59
    %v64 = vpack.c.b16 %v62, %v61
    %vm67 = vcmask 261120
    %v69 = vsel %vm67, %v43, 0
    %71 = vmatprep.subr.bf16.mxu0 0
    %72 = vmatpush1.bf16.msra.mxu0 %v63
    %73 = vmatprep.subr.bf16.mxu0 0
    %74 = vmatpush1.bf16.msra.mxu0 %v64
    %75 = vmatprep.subr.bf16.mxu0 0
    %76 = vmatpush1.bf16.msra.mxu0 0
    %77 = vmatprep.subr.bf16.mxu0 0
    %78 = vmatpush1.bf16.msra.mxu0 0
    %79 = vmatprep.subr.bf16.mxu0 0
    %80 = vmatpush1.bf16.msra.mxu0 0
    %81 = vmatprep.subr.bf16.mxu0 0
    %82 = vmatpush1.bf16.msra.mxu0 0
    %83 = vmatprep.subr.bf16.mxu0 0
    %84 = vmatpush1.bf16.msra.mxu0 0
    %85 = vmatprep.subr.bf16.mxu0 0
    %86 = vmatpush1.bf16.msra.mxu0 0
    %87 = vmatprep.subr.bf16.mxu0 0
    %88 = vmatpush1.bf16.msra.mxu0 0
    %89 = vmatprep.subr.bf16.mxu0 0
    %90 = vmatpush1.bf16.msra.mxu0 0
    %91 = vmatprep.subr.bf16.mxu0 0
    %92 = vmatpush1.bf16.msra.mxu0 0
    %93 = vmatprep.subr.bf16.mxu0 0
    %94 = vmatpush1.bf16.msra.mxu0 0
    %95 = vmatprep.subr.bf16.mxu0 0
    %96 = vmatpush1.bf16.msra.mxu0 0
    %97 = vmatprep.subr.bf16.mxu0 0
    %98 = vmatpush1.bf16.msra.mxu0 0
    %99 = vmatprep.subr.bf16.mxu0 0
    %100 = vmatpush1.bf16.msra.mxu0 0
    %101 = vmatprep.subr.bf16.mxu0 0
    %102 = vmatpush1.bf16.msra.mxu0 0
    %103 = vmatprep.mubr.bf16.mxu0 0
    %104 = vmatmul.mubr.bf16.gmra.mrb[0].mxu0 %v69
    %v105 = vpop.f32.mrb[0].mxu0
    %v106 = vadd.f32 %v53, %v105
    %v107 = vpop.f32.mrb[0].mxu0
    %v108 = vpop.f32.mrb[0].mxu0
    %v109 = vpop.f32.mrb[0].mxu0
    %110 = vdwg.mxu0
    %v111 = vmax.f32 %v106, 0.0
    %v112 = vpack.c.bf16 %v111, %v111
    %vm113 = vcmask 516096
    %114 = vst.msk [vmem:[#allocation7] sm:$0x1] %vm113, %v112
    // Predicated region
    $region22: #{tpu_custom_call.1} parent=1 // pred_check
      _
    $region23: #{tpu_custom_call.1} parent=1 // pred_check_branch
      %116 = sbr.rel (0) target = $region25
    $region24: #{tpu_custom_call.1} parent=1 // pred_region
      %s118 = ssub.s32 16, 16
      %119 = vsyncadd [#allocation4], %s118
      %s121 = sshll.u32 [#allocation7], 4
      %s122 = int_to_ptr.vmem [resolvable:$true] %s121
      %124 = dma.vmem_to_hbm [thread:$0]  %s122, 16, %s3, [#allocation4]
    $region25: #{tpu_custom_call.1} parent=1 // pred_fallthru
      _
    // Predicated region
    $region26: #{tpu_custom_call.1} parent=1 // pred_check
      _
    $region27: #{tpu_custom_call.1} parent=1 // pred_check_branch
      %126 = sbr.rel (0) target = $region29
    $region28: #{tpu_custom_call.1} parent=1 // pred_region
      %127 = dma.done [#allocation4], 16
    $region29: #{tpu_custom_call.1} parent=1 // pred_fallthru
      _
    %128 = vsyncpa [#allocation3], 1
    %129 = vsyncpa [#allocation6], 1
    %130 = vsyncpa [#allocation4], 1

</llo_original>
